<compile_context>
chip_gen: v7x
topology: tpu7x:2x2x1
jax: 0.10.0
libtpu: 0.0.40
codegen_flags: <defaults>
</compile_context>

<pallas_src>
import functools

import jax
import jax.numpy as jnp
from jax.experimental import pallas as pl
from jax.experimental.pallas import tpu as pltpu


def _drop_position_kernel(x_ref, bits_ref, o_ref, *, threshold: int, scale: float):
    # x_ref: (BN, C, TL); bits_ref: (BN, 1, TL) uint32 (one word per position,
    # shared across channels); o_ref: (BN, C, TL).
    keep_scaled = jnp.where(
        bits_ref[...] >= jnp.uint32(threshold),     # keep with prob (1 - p)
        jnp.asarray(scale, dtype=o_ref.dtype),      # scale folded into the mask
        jnp.asarray(0, dtype=o_ref.dtype),
    )                                               # (BN, 1, TL)
    o_ref[...] = x_ref[...] * keep_scaled           # broadcast over C, stays in x dtype


def _pick_lane_tile(L: int, C: int, itemsize: int, cap_bytes: int) -> int:
    """Lane-axis tile: a multiple of 128 that divides L, with C*TL*itemsize <= cap."""
    if L % 128 != 0:
        return L  # ragged L: take the full axis (block equals full array dim)
    max_tl = max(128, (cap_bytes // max(1, C * itemsize)) // 128 * 128)
    if L <= max_tl:
        return L
    tl = max_tl
    while tl > 128 and L % tl != 0:
        tl -= 128
    return tl


def drop_position(x: jax.Array, key: jax.Array, p: float = 0.1,
                  training: bool = True) -> jax.Array:
    """Pallas implementation of DropPosition.forward for x of shape (N, C, L)."""
    if not training or p == 0.0:
        return x
    if not (0.0 <= p < 1.0):
        raise ValueError("DropPosition: p must be in [0, 1) in training mode")

    N, C, L = x.shape
    itemsize = jnp.dtype(x.dtype).itemsize

    # One uint32 per (batch row, position); the keep decision is taken in the
    # integer domain inside the kernel: keep iff bits >= p * 2^32.
    bits = jax.random.bits(key, (N, 1, L), dtype=jnp.uint32)
    threshold = min(int(round(p * 4294967296.0)), 4294967295)
    scale = 1.0 / (1.0 - p)

    # Block sizing: cap the x block at ~2 MiB (v7x-safe with 2x double-buffered
    # input + output plus the small bits block), lane tile a multiple of 128.
    cap_bytes = 2 * 1024 * 1024
    TL = _pick_lane_tile(L, C, itemsize, cap_bytes)
    if TL == L:
        # Pack multiple batch rows per block to amortize per-grid-step overhead.
        row_bytes = max(1, C * L * itemsize)
        BN = max(1, min(N, cap_bytes // row_bytes))
        while N % BN != 0:
            BN -= 1
    else:
        BN = 1

    grid = (N // BN, pl.cdiv(L, TL))
    kernel = functools.partial(_drop_position_kernel, threshold=threshold, scale=scale)

    return pl.pallas_call(
        kernel,
        out_shape=jax.ShapeDtypeStruct((N, C, L), x.dtype),
        grid=grid,
        in_specs=[
            pl.BlockSpec((BN, C, TL), lambda b, l: (b, 0, l)),
            pl.BlockSpec((BN, 1, TL), lambda b, l: (b, 0, l)),
        ],
        out_specs=pl.BlockSpec((BN, C, TL), lambda b, l: (b, 0, l)),
        compiler_params=pltpu.CompilerParams(
            dimension_semantics=("parallel", "parallel"),  # no carried state
        ),
        cost_estimate=pl.CostEstimate(
            flops=2 * N * C * L,
            transcendentals=0,
            bytes_accessed=2 * N * C * L * itemsize + N * L * 4,
        ),
    )(x, bits)


if __name__ == "__main__":
    key = jax.random.PRNGKey(0)
    kx, kmask = jax.random.split(key)

    N, C, L = 2, 8, 128
    x = jax.random.normal(kx, (N, C, L), dtype=jnp.float32)
    p = 0.1

    y = drop_position(x, kmask, p=p, training=True)
    y = jax.block_until_ready(y)
    assert y.shape == x.shape and y.dtype == x.dtype

    # Pure-JAX reference using the same random words the kernel consumed.
    bits = jax.random.bits(kmask, (N, 1, L), dtype=jnp.uint32)
    thr = jnp.uint32(min(int(round(p * 4294967296.0)), 4294967295))
    mask_ref = jnp.where(bits >= thr, jnp.float32(1.0 / (1.0 - p)), jnp.float32(0.0))
    y_ref = x * mask_ref
    assert bool(jnp.allclose(y, y_ref, rtol=1e-6, atol=0.0))

    # Surviving positions equal x / (1 - p); dropped positions are 0.
    ratio_ok = jnp.where(y == 0, True, jnp.isclose(y, x / (1.0 - p), rtol=1e-5))
    assert bool(jnp.all(ratio_ok))

    # Mask is shared across the channel axis: a position is dropped for every
    # channel of that batch row, or for none of them.
    zero = (y == 0) & (x != 0)
    assert bool(jnp.all(zero.all(axis=1) | (~zero.any(axis=1))))

    # Eval mode is identity.
    y_eval = drop_position(x, kmask, p=p, training=False)
    assert bool(jnp.all(y_eval == x))

    print("KERNEL_OK")
</pallas_src>

<mosaic_0001>
module attributes {stable_mosaic.version = 11 : i64} {
  func.func @_drop_position_kernel(%arg0: i32, %arg1: i32, %arg2: memref<2x8x128xf32, #tpu.memory_space<vmem>>, %arg3: memref<2x1x128xi32, #tpu.memory_space<vmem>>, %arg4: memref<2x8x128xf32, #tpu.memory_space<vmem>>) attributes {dimension_semantics = [#tpu.dimension_semantics<parallel>, #tpu.dimension_semantics<parallel>], iteration_bounds = array<i64: 1, 1>, scalar_prefetch = 0 : i64, scratch_operands = 0 : i64, tpu.core_type = #tpu.core_type<tc>, window_params = [{transform_indices = @transform_0, window_bounds = array<i64: 2, 8, 128>}, {transform_indices = @transform_1, window_bounds = array<i64: 2, 1, 128>}, {transform_indices = @transform_2, window_bounds = array<i64: 2, 8, 128>}]} {
    %c0 = arith.constant 0 : index
    %c0_0 = arith.constant 0 : index
    %c0_1 = arith.constant 0 : index
    %0 = vector.load %arg3[%c0, %c0_0, %c0_1] : memref<2x1x128xi32, #tpu.memory_space<vmem>>, vector<2x1x128xi32>
    %c429496730_i32 = arith.constant 429496730 : i32
    %1 = vector.broadcast %c429496730_i32 : i32 to vector<2x1x128xi32>
    %2 = arith.cmpi uge, %0, %1 : vector<2x1x128xi32>
    %cst = arith.constant 1.11111116 : f32
    %cst_2 = arith.constant 0.000000e+00 : f32
    %3 = vector.broadcast %cst : f32 to vector<2x1x128xf32>
    %4 = vector.broadcast %cst_2 : f32 to vector<2x1x128xf32>
    %5 = arith.select %2, %3, %4 : vector<2x1x128xi1>, vector<2x1x128xf32>
    %c0_3 = arith.constant 0 : index
    %c0_4 = arith.constant 0 : index
    %c0_5 = arith.constant 0 : index
    %6 = vector.load %arg2[%c0_3, %c0_4, %c0_5] : memref<2x8x128xf32, #tpu.memory_space<vmem>>, vector<2x8x128xf32>
    %7 = vector.broadcast %5 : vector<2x1x128xf32> to vector<2x8x128xf32>
    %8 = arith.mulf %6, %7 : vector<2x8x128xf32>
    %c0_6 = arith.constant 0 : index
    %c0_7 = arith.constant 0 : index
    %c0_8 = arith.constant 0 : index
    %9 = vector.load %arg4[%c0_6, %c0_7, %c0_8] : memref<2x8x128xf32, #tpu.memory_space<vmem>>, vector<2x8x128xf32>
    tpu.vector_store %arg4[%c0_6, %c0_7, %c0_8], %8 {strides = array<i32>} : memref<2x8x128xf32, #tpu.memory_space<vmem>>, vector<2x8x128xf32>,
    return
  }
  func.func @transform_0(%arg0: i32, %arg1: i32) -> (i32, i32, i32) {
    %c0_i32 = arith.constant 0 : i32
    %c0_i32_0 = arith.constant 0 : i32
    return %arg0, %c0_i32, %arg1 : i32, i32, i32
  }
  func.func @transform_1(%arg0: i32, %arg1: i32) -> (i32, i32, i32) {
    %c0_i32 = arith.constant 0 : i32
    %c0_i32_0 = arith.constant 0 : i32
    return %arg0, %c0_i32, %arg1 : i32, i32, i32
  }
  func.func @transform_2(%arg0: i32, %arg1: i32) -> (i32, i32, i32) {
    %c0_i32 = arith.constant 0 : i32
    %c0_i32_0 = arith.constant 0 : i32
    return %arg0, %c0_i32, %arg1 : i32, i32, i32
  }
}

</mosaic_0001>

<llo_original>
// kernel: tpu_custom_call.1
$region0: #{tpu_custom_call.1}
  #allocation0 [shape = 'u32[]', space=smem, size = 0x4, offset = 0x4, fixed_abs, tag = 'smem constant byte address 0x4 - core index']
  #allocation1 [shape = 'u32[144,128]{1,0:T(1,128)}', space=vmem, size = 0x12000, scoped, tag = 'internal scratch']
  %s0 = inlined_call_operand.hbm [shape: f32[2,8,128], index: 0, kind: input, shape index: {}]
  %s1 = inlined_call_operand.vmem [shape: u32[2,1,128], index: 1, kind: input, shape index: {}]
  %s2 = inlined_call_operand.hbm [shape: f32[2,8,128], index: 2, kind: output, shape index: {}]
  %s3 = sld [smem:[#allocation0]]
  $region22: #{tpu_custom_call.1} parent=0
    _
  %s5 = ssub.s32 1, %s3
  %s6 = scalar_select 0, %s5, %s3
  $region1: #{tpu_custom_call.1} parent=0
    #allocation2 [shape = 'u8[8192]{0}', space=vmem, size = 0x2000, scoped, tag = 'input window, operand 0, single buffered']
    #allocation3 [shape = 's32[1]{0}', space=sflag, size = 0x4, scoped, tag = 'scoped memory for tpu_custom_call.1']
    #allocation4 [shape = 's32[1]{0}', space=sflag, size = 0x4, scoped, tag = 'scoped memory for tpu_custom_call.1']
    #allocation5 [shape = 'u8[8192]{0}', space=vmem, size = 0x2000, scoped, tag = 'output window, operand 0, single buffered']
    %7 = vsyncpa [#allocation3], 0
    %8 = vsyncpa [#allocation4], 0
    // Predicated region
    $region2: #{tpu_custom_call.1} parent=1 // pred_check
      _
    $region3: #{tpu_custom_call.1} parent=1 // pred_check_branch
      %10 = sbr.rel (0) target = $region5
    $region4: #{tpu_custom_call.1} parent=1 // pred_region
      %s12 = ssub.s32 256, 256
      %13 = vsyncadd [#allocation3], %s12
      %s14 = sshll.u32 [#allocation2], 4
      %s15 = int_to_ptr.vmem [resolvable:$true] %s14
      %20 = dma.hbm_to_vmem [thread:$0]  %s0, 256, %s15, [#allocation3], 128, 128, 8
    $region5: #{tpu_custom_call.1} parent=1 // pred_fallthru
      _
    // Predicated region
    $region6: #{tpu_custom_call.1} parent=1 // pred_check
      _
    $region7: #{tpu_custom_call.1} parent=1 // pred_check_branch
      %22 = sbr.rel (0) target = $region9
    $region8: #{tpu_custom_call.1} parent=1 // pred_region
      _
    $region9: #{tpu_custom_call.1} parent=1 // pred_fallthru
      _
    // Predicated region
    $region10: #{tpu_custom_call.1} parent=1 // pred_check
      _
    $region11: #{tpu_custom_call.1} parent=1 // pred_check_branch
      %24 = sbr.rel (0) target = $region13
    $region12: #{tpu_custom_call.1} parent=1 // pred_region
      %25 = dma.done [#allocation3], 256
    $region13: #{tpu_custom_call.1} parent=1 // pred_fallthru
      _
    %v26 = vld [vmem:[%s1] sm:$0x1]
    %v27 = vld [vmem:[%s1 + $0x1] sm:$0x1]
    %vm28 = vcmp.ge.u32.totalorder %v26, 429496730
    %vm29 = vcmp.ge.u32.totalorder %v27, 429496730
    %v30 = vsel %vm28, 1.1111112, 0.0
    %v31 = vsel %vm29, 1.1111112, 0.0
    %v32 = vld [vmem:[#allocation2] sm:$0xff]
    %v33 = vld [vmem:[#allocation2 + $0x8] sm:$0xff]
    %v36 = vlaneseq
    %v37 = vshrl.u32 %v36, 7
    %v38 = vsub.s32 0, %v37
    %v39 = vrot.slane %v30, %v38
    %v40 = vlaneseq
    %v41 = vshrl.u32 %v40, 7
    %v42 = vsub.s32 0, %v41
    %v43 = vrot.slane %v31, %v42
    %v46 = vmul.f32 %v32, %v39
    %v47 = vmul.f32 %v33, %v43
    %48 = vst [vmem:[#allocation5] sm:$0xff] %v46
    %49 = vst [vmem:[#allocation5 + $0x8] sm:$0xff] %v47
    // Predicated region
    $region14: #{tpu_custom_call.1} parent=1 // pred_check
      _
    $region15: #{tpu_custom_call.1} parent=1 // pred_check_branch
      %51 = sbr.rel (0) target = $region17
    $region16: #{tpu_custom_call.1} parent=1 // pred_region
      %s53 = ssub.s32 256, 256
      %54 = vsyncadd [#allocation4], %s53
      %s55 = sshll.u32 [#allocation5], 4
      %s56 = int_to_ptr.vmem [resolvable:$true] %s55
      %61 = dma.vmem_to_hbm [thread:$0]  %s56, 256, %s2, [#allocation4], 128, 128, 8
    $region17: #{tpu_custom_call.1} parent=1 // pred_fallthru
      _
    // Predicated region
    $region18: #{tpu_custom_call.1} parent=1 // pred_check
      _
    $region19: #{tpu_custom_call.1} parent=1 // pred_check_branch
      %63 = sbr.rel (0) target = $region21
    $region20: #{tpu_custom_call.1} parent=1 // pred_region
      %64 = dma.done [#allocation4], 256
    $region21: #{tpu_custom_call.1} parent=1 // pred_fallthru
      _
    %65 = vsyncpa [#allocation3], 1
    %66 = vsyncpa [#allocation4], 1

</llo_original>
